<compile_context>
chip_gen: v7x
topology: tpu7x:2x2x1
jax: 0.10.0
libtpu: 0.0.40
codegen_flags: <defaults>
</compile_context>

<pallas_src>
import functools

import jax
import jax.numpy as jnp
from jax import lax
from jax.experimental import pallas as pl
from jax.experimental.pallas import tpu as pltpu


# --------------------------------------------------------------------------
# Pass 1: row L2 normalization (f32 math) -> single bf16 MXU operand.
# --------------------------------------------------------------------------
def _normalize_kernel(x_ref, o_ref):
    x = x_ref[...].astype(jnp.float32)
    ssq = jnp.sum(x * x, axis=-1, keepdims=True)
    # PyTorch CosineSimilarity clamps the *product* of norms at 1e-8; a
    # per-row clamp at 1e-8 is identical for non-degenerate embeddings
    # (and maps zero pad rows to zero).
    inv = lax.rsqrt(jnp.maximum(ssq, 1e-16))
    o_ref[...] = (x * inv).astype(o_ref.dtype)


# --------------------------------------------------------------------------
# Pass 2a: K-resident path.  One row tile vs ALL columns per grid step.
# --------------------------------------------------------------------------
def _ntxent_resident_kernel(q_ref, k_ref, o_ref, *, batch, n_valid, inv_tau):
    qi = pl.program_id(0)
    tile_q = q_ref.shape[0]
    n_pad = k_ref.shape[0]

    # (tile_q, n_pad) logits on the MXU (bf16 in, f32 accumulate); 1/tau is a
    # single VALU multiply that hides under the MXU time.
    s = lax.dot_general(q_ref[...], k_ref[...], (((1,), (1,)), ((), ())),
                        preferred_element_type=jnp.float32)
    s = s * inv_tau

    # Broadcasted (tile_q,1) / (1,n_pad) ids -- never full (N, N) iotas.
    row = qi * tile_q + lax.broadcasted_iota(jnp.int32, (tile_q, 1), 0)
    col = lax.broadcasted_iota(jnp.int32, (1, n_pad), 1)

    # Mask self-similarity and zero-padded columns out of the LSE.
    # (-1e30, not -inf, keeps the exp chain NaN-free.)
    invalid = col == row
    if n_valid < n_pad:  # static
        invalid = jnp.logical_or(invalid, col >= n_valid)
    s = jnp.where(invalid, -1e30, s)

    m = jnp.max(s, axis=-1, keepdims=True)
    l = jnp.sum(jnp.exp(s - m), axis=-1, keepdims=True)

    # Positive logit: column (i + B) mod 2B -- never masked for valid rows.
    tgt = row + batch
    tgt = jnp.where(tgt >= n_valid, tgt - n_valid, tgt)
    pos = jnp.sum(jnp.where(col == tgt, s, 0.0), axis=-1, keepdims=True)

    o_ref[...] = (m + jnp.log(l)) - pos


# --------------------------------------------------------------------------
# Pass 2b: streaming fallback.  Flash-style online LSE over column tiles.
# --------------------------------------------------------------------------
def _ntxent_stream_kernel(q_ref, k_ref, o_ref, m_sc, l_sc, pos_sc, self_sc, *,
                          batch, n_valid, pad_cols, inv_tau):
    qi = pl.program_id(0)
    ki = pl.program_id(1)
    nk = pl.num_programs(1)
    tile_q = q_ref.shape[0]
    tile_k = k_ref.shape[0]

    @pl.when(ki == 0)
    def _():
        m_sc[...] = jnp.full_like(m_sc, -1e30)
        l_sc[...] = jnp.zeros_like(l_sc)
        pos_sc[...] = jnp.zeros_like(pos_sc)
        self_sc[...] = jnp.zeros_like(self_sc)

    s = lax.dot_general(q_ref[...], k_ref[...], (((1,), (1,)), ((), ())),
                        preferred_element_type=jnp.float32)
    s = s * inv_tau

    # UNMASKED online LSE: the hot loop has no iota / compare / select.
    # Self-similarity and zero-pad columns are removed at finalize: their
    # contributions to l are exactly exp(s_ii - m) and pad_cols * exp(-m).
    m_prev = m_sc[...]
    m_cur = jnp.maximum(m_prev, jnp.max(s, axis=-1, keepdims=True))
    alpha = jnp.exp(m_prev - m_cur)          # underflows to 0 on the 1st tile
    l_sc[...] = alpha * l_sc[...] + jnp.sum(jnp.exp(s - m_cur),
                                            axis=-1, keepdims=True)
    m_sc[...] = m_cur

    r0 = qi * tile_q
    c0 = ki * tile_k

    # Self-similarity extraction: only tiles the diagonal passes through.
    @pl.when(jnp.logical_and(r0 < c0 + tile_k, c0 < r0 + tile_q))
    def _():
        row = r0 + lax.broadcasted_iota(jnp.int32, (tile_q, 1), 0)
        col = c0 + lax.broadcasted_iota(jnp.int32, (1, tile_k), 1)
        self_sc[...] += jnp.sum(jnp.where(col == row, s, 0.0),
                                axis=-1, keepdims=True)

    # Positive extraction: only column tiles intersecting the circular arc of
    # positives of this row tile (over-approximate test -> extra hits add 0).
    p0 = r0 + batch
    p0 = jnp.where(p0 >= n_valid, p0 - n_valid, p0)
    d1 = jnp.mod(c0 - p0 + 2 * n_valid, n_valid)
    d2 = jnp.mod(p0 - c0 + 2 * n_valid, n_valid)

    @pl.when(jnp.logical_or(d1 < tile_q, d2 < tile_k))
    def _():
        row = r0 + lax.broadcasted_iota(jnp.int32, (tile_q, 1), 0)
        col = c0 + lax.broadcasted_iota(jnp.int32, (1, tile_k), 1)
        tgt = row + batch
        tgt = jnp.where(tgt >= n_valid, tgt - n_valid, tgt)
        pos_sc[...] += jnp.sum(jnp.where(col == tgt, s, 0.0),
                               axis=-1, keepdims=True)

    @pl.when(ki == nk - 1)
    def _():
        m = m_sc[...]
        l = l_sc[...] - jnp.exp(self_sc[...] - m)
        if pad_cols:  # static
            l = l - float(pad_cols) * jnp.exp(-m)
        l = jnp.maximum(l, 1e-30)            # guard against f32 cancellation
        o_ref[...] = (m + jnp.log(l)) - pos_sc[...]


def _largest_block(n, candidates=(1024, 512, 256)):
    for c in candidates:
        if n % c == 0:
            return c
    return n


# --------------------------------------------------------------------------
# Wrapper
# --------------------------------------------------------------------------
def ntxent_loss(z_i, z_j, temperature: float = 0.1, reduction: str = "mean",
                max_resident_bytes: int = 40 * 1024 * 1024):
    """NT-Xent loss.  z_i, z_j: (B, D).  Returns scalar ('mean'/'sum') or (2B,)."""
    assert z_i.shape == z_j.shape and z_i.ndim == 2
    b, d = z_i.shape
    n = 2 * b
    inv_tau = 1.0 / float(temperature)

    # Pad D to a lane-dense multiple of 128 and N=2B to an MXU-native multiple
    # of 256.  Zero rows/cols change neither norms nor dot products; pad rows
    # are sliced off before the reduction, pad cols are masked/corrected.
    d_pad = ((d + 127) // 128) * 128
    n_pad = ((n + 255) // 256) * 256
    pad_rows = n_pad - n

    r = jnp.concatenate([z_i, z_j], axis=0)
    if d_pad != d or pad_rows:
        r = jnp.pad(r, ((0, pad_rows), (0, d_pad - d)))

    # ---- pass 1: row L2-normalization -> one bf16 operand ------------------
    blk1 = _largest_block(n_pad)
    rn = pl.pallas_call(
        _normalize_kernel,
        out_shape=jax.ShapeDtypeStruct((n_pad, d_pad), jnp.bfloat16),
        grid_spec=pltpu.PrefetchScalarGridSpec(
            num_scalar_prefetch=0,
            grid=(n_pad // blk1,),
            in_specs=[pl.BlockSpec((blk1, d_pad), lambda i: (i, 0))],
            out_specs=pl.BlockSpec((blk1, d_pad), lambda i: (i, 0)),
        ),
        compiler_params=pltpu.CompilerParams(
            dimension_semantics=("parallel",)),
    )(r)

    # ---- pass 2: logits + masked log-sum-exp --------------------------------
    tile_q = 256
    k_bytes = n_pad * d_pad * 2
    # 2x K (pipeline buffers) + ~3 live (tile_q, n_pad) f32 slabs + q buffers.
    resident_est = (2 * k_bytes + 3 * tile_q * n_pad * 4
                    + 2 * tile_q * d_pad * 2 + (1 << 20))

    cost = pl.CostEstimate(flops=2 * n_pad * n_pad * d_pad,
                           transcendentals=n_pad * n_pad,
                           bytes_accessed=2 * n_pad * d_pad * 2 + n_pad * 4)

    if resident_est <= max_resident_bytes:
        # K-resident path: K is DMA'd once (constant index_map) and reused.
        vmem_limit = int(min(48 * 1024 * 1024,
                             max(32 * 1024 * 1024, resident_est + (8 << 20))))
        kernel = functools.partial(_ntxent_resident_kernel, batch=b,
                                   n_valid=n, inv_tau=inv_tau)
        per_row = pl.pallas_call(
            kernel,
            out_shape=jax.ShapeDtypeStruct((n_pad, 1), jnp.float32),
            grid_spec=pltpu.PrefetchScalarGridSpec(
                num_scalar_prefetch=0,
                grid=(n_pad // tile_q,),
                in_specs=[pl.BlockSpec((tile_q, d_pad), lambda i: (i, 0)),
                          pl.BlockSpec((n_pad, d_pad), lambda i: (0, 0))],
                out_specs=pl.BlockSpec((tile_q, 1), lambda i: (i, 0)),
            ),
            compiler_params=pltpu.CompilerParams(
                dimension_semantics=("parallel",),
                vmem_limit_bytes=vmem_limit),
            cost_estimate=cost,
        )(rn, rn)
    else:
        # Streaming fallback: large row tiles, 256-wide column tiles.
        tile_qs = 512 if n_pad % 512 == 0 else 256
        tile_k = 256
        num_k = n_pad // tile_k
        k_idx = lambda qi, ki: (ki, 0)
        if num_k >= 4:
            # Deeper K pipelining: per-tile compute is short at small d_pad.
            k_spec = pl.BlockSpec((tile_k, d_pad), k_idx,
                                  pipeline_mode=pl.Buffered(3))
        else:
            k_spec = pl.BlockSpec((tile_k, d_pad), k_idx)
        kernel = functools.partial(_ntxent_stream_kernel, batch=b, n_valid=n,
                                   pad_cols=pad_rows, inv_tau=inv_tau)
        per_row = pl.pallas_call(
            kernel,
            out_shape=jax.ShapeDtypeStruct((n_pad, 1), jnp.float32),
            grid_spec=pltpu.PrefetchScalarGridSpec(
                num_scalar_prefetch=0,
                grid=(n_pad // tile_qs, num_k),
                in_specs=[pl.BlockSpec((tile_qs, d_pad), lambda qi, ki: (qi, 0)),
                          k_spec],
                out_specs=pl.BlockSpec((tile_qs, 1), lambda qi, ki: (qi, 0)),
                scratch_shapes=[pltpu.VMEM((tile_qs, 1), jnp.float32),  # m
                                pltpu.VMEM((tile_qs, 1), jnp.float32),  # l
                                pltpu.VMEM((tile_qs, 1), jnp.float32),  # pos
                                pltpu.VMEM((tile_qs, 1), jnp.float32)], # self
            ),
            compiler_params=pltpu.CompilerParams(
                dimension_semantics=("parallel", "arbitrary"),
                vmem_limit_bytes=32 * 1024 * 1024),
            cost_estimate=cost,
        )(rn, rn)

    per_row = per_row[:n, 0]
    if reduction == "mean":
        return jnp.mean(per_row)
    if reduction == "sum":
        return jnp.sum(per_row)
    return per_row  # reduction == 'none'


# --------------------------------------------------------------------------
# Pure-JAX f32 reference (intended NT-Xent semantics) for validation.
# --------------------------------------------------------------------------
def _ntxent_reference(z_i, z_j, temperature=0.1):
    b = z_i.shape[0]
    r = jnp.concatenate([z_i, z_j], axis=0).astype(jnp.float32)
    n = 2 * b
    norm = jnp.linalg.norm(r, axis=-1, keepdims=True)
    sim = (r @ r.T) / jnp.maximum(norm * norm.T, 1e-8) / temperature
    idx = jnp.arange(n)
    pos = sim[idx, (idx + b) % n]
    masked = jnp.where(jnp.eye(n, dtype=bool), -jnp.inf, sim)
    lse = jax.scipy.special.logsumexp(masked, axis=-1)
    return jnp.mean(lse - pos)


if __name__ == "__main__":
    key = jax.random.PRNGKey(0)
    k1, k2, k3, k4, k5, k6 = jax.random.split(key, 6)

    # 1) Small, heavily padded case (B=8, D=32 -> N=16 padded to 256).
    B, D = 8, 32
    z_i = jax.random.normal(k1, (B, D), dtype=jnp.float32)
    z_j = jax.random.normal(k2, (B, D), dtype=jnp.float32)
    loss = jax.block_until_ready(ntxent_loss(z_i, z_j, temperature=0.1))
    ref = jax.block_until_ready(_ntxent_reference(z_i, z_j, temperature=0.1))
    assert jnp.allclose(loss, ref, rtol=5e-2, atol=5e-2), (loss, ref)

    # 2) Multi-row-tile K-resident case (B=256, D=64 -> N=512, two row tiles).
    B2, D2 = 256, 64
    z_i2 = jax.random.normal(k3, (B2, D2), dtype=jnp.float32)
    z_j2 = jax.random.normal(k4, (B2, D2), dtype=jnp.float32)
    loss2 = jax.block_until_ready(ntxent_loss(z_i2, z_j2, temperature=0.1))
    ref2 = jax.block_until_ready(_ntxent_reference(z_i2, z_j2, temperature=0.1))
    assert jnp.allclose(loss2, ref2, rtol=5e-2, atol=5e-2), (loss2, ref2)

    # 3) Force the streaming fallback on a small problem with row/col padding
    #    (B=380 -> N=760 padded to 768, 3x3 grid of 256x256 tiles).
    B3, D3 = 380, 48
    z_i3 = jax.random.normal(k5, (B3, D3), dtype=jnp.float32)
    z_j3 = jax.random.normal(k6, (B3, D3), dtype=jnp.float32)
    loss3 = jax.block_until_ready(
        ntxent_loss(z_i3, z_j3, temperature=0.1, max_resident_bytes=0))
    ref3 = jax.block_until_ready(_ntxent_reference(z_i3, z_j3, temperature=0.1))
    assert jnp.allclose(loss3, ref3, rtol=5e-2, atol=5e-2), (loss3, ref3)

    print("KERNEL_OK")
</pallas_src>

<mosaic_0001>
module attributes {stable_mosaic.version = 11 : i64} {
  func.func @_normalize_kernel(%arg0: i32, %arg1: memref<256x128xf32, #tpu.memory_space<vmem>>, %arg2: memref<256x128xbf16, #tpu.memory_space<vmem>>) attributes {dimension_semantics = [#tpu.dimension_semantics<parallel>], iteration_bounds = array<i64: 1>, scalar_prefetch = 0 : i64, scratch_operands = 0 : i64, tpu.core_type = #tpu.core_type<tc>, window_params = [{transform_indices = @transform_0, window_bounds = array<i64: 256, 128>}, {transform_indices = @transform_1, window_bounds = array<i64: 256, 128>}]} {
    %c0 = arith.constant 0 : index
    %c0_0 = arith.constant 0 : index
    %0 = vector.load %arg1[%c0, %c0_0] : memref<256x128xf32, #tpu.memory_space<vmem>>, vector<256x128xf32>
    %1 = arith.mulf %0, %0 : vector<256x128xf32>
    %cst = arith.constant dense<0.000000e+00> : vector<256xf32>
    %2 = vector.multi_reduction <add>, %1, %cst [1] : vector<256x128xf32> to vector<256xf32>
    %3 = vector.shape_cast %2 : vector<256xf32> to vector<256x1xf32>
    %cst_1 = arith.constant 1.000000e-16 : f32
    %4 = vector.broadcast %cst_1 : f32 to vector<256x1xf32>
    %5 = arith.maximumf %3, %4 : vector<256x1xf32>
    %6 = math.rsqrt %5 : vector<256x1xf32>
    %7 = vector.broadcast %6 : vector<256x1xf32> to vector<256x128xf32>
    %8 = arith.mulf %0, %7 : vector<256x128xf32>
    %9 = arith.truncf %8 : vector<256x128xf32> to vector<256x128xbf16>
    %c0_2 = arith.constant 0 : index
    %c0_3 = arith.constant 0 : index
    %10 = vector.load %arg2[%c0_2, %c0_3] : memref<256x128xbf16, #tpu.memory_space<vmem>>, vector<256x128xbf16>
    tpu.vector_store %arg2[%c0_2, %c0_3], %9 {strides = array<i32>} : memref<256x128xbf16, #tpu.memory_space<vmem>>, vector<256x128xbf16>,
    return
  }
  func.func @transform_0(%arg0: i32) -> (i32, i32) {
    %c0_i32 = arith.constant 0 : i32
    %c0_i32_0 = arith.constant 0 : i32
    return %arg0, %c0_i32 : i32, i32
  }
  func.func @transform_1(%arg0: i32) -> (i32, i32) {
    %c0_i32 = arith.constant 0 : i32
    %c0_i32_0 = arith.constant 0 : i32
    return %arg0, %c0_i32 : i32, i32
  }
}

</mosaic_0001>

<llo_original>
// kernel: tpu_custom_call.1
$region0: #{tpu_custom_call.1}
  #allocation0 [shape = 'u32[]', space=smem, size = 0x4, offset = 0x4, fixed_abs, tag = 'smem constant byte address 0x4 - core index']
  #allocation1 [shape = 'u32[144,128]{1,0:T(1,128)}', space=vmem, size = 0x12000, scoped, tag = 'internal scratch']
  %s0 = inlined_call_operand.hbm [shape: f32[256,128], index: 0, kind: input, shape index: {}]
  %s1 = inlined_call_operand.hbm [shape: bf16[256,128], index: 1, kind: output, shape index: {}]
  %s2 = sld [smem:[#allocation0]]
  $region18: #{tpu_custom_call.1} parent=0
    _
  %s4 = ssub.s32 1, %s2
  %s5 = scalar_select 0, %s4, %s2
  $region1: #{tpu_custom_call.1} parent=0
    #allocation2 [shape = 'u8[131072]{0}', space=vmem, size = 0x20000, scoped, tag = 'input window, operand 0, single buffered']
    #allocation3 [shape = 's32[1]{0}', space=sflag, size = 0x4, scoped, tag = 'scoped memory for tpu_custom_call.1']
    #allocation4 [shape = 's32[1]{0}', space=sflag, size = 0x4, scoped, tag = 'scoped memory for tpu_custom_call.1']
    #allocation5 [shape = 'u8[65536]{0}', space=vmem, size = 0x10000, scoped, tag = 'output window, operand 0, single buffered']
    %6 = vsyncpa [#allocation3], 0
    %7 = vsyncpa [#allocation4], 0
    // Predicated region
    $region2: #{tpu_custom_call.1} parent=1 // pred_check
      _
    $region3: #{tpu_custom_call.1} parent=1 // pred_check_branch
      %9 = sbr.rel (0) target = $region5
    $region4: #{tpu_custom_call.1} parent=1 // pred_region
      %s11 = ssub.s32 4096, 4096
      %12 = vsyncadd [#allocation3], %s11
      %s13 = sshll.u32 [#allocation2], 4
      %s14 = int_to_ptr.vmem [resolvable:$true] %s13
      %19 = dma.hbm_to_vmem [thread:$0]  %s0, 4096, %s14, [#allocation3], 128, 128, 8
    $region5: #{tpu_custom_call.1} parent=1 // pred_fallthru
      _
    // Predicated region
    $region6: #{tpu_custom_call.1} parent=1 // pred_check
      _
    $region7: #{tpu_custom_call.1} parent=1 // pred_check_branch
      %21 = sbr.rel (0) target = $region9
    $region8: #{tpu_custom_call.1} parent=1 // pred_region
      %22 = dma.done [#allocation3], 4096
    $region9: #{tpu_custom_call.1} parent=1 // pred_fallthru
      _
    %v23 = vld [vmem:[#allocation2] sm:$0xff]
    %v24 = vld [vmem:[#allocation2 + $0x8] sm:$0xff]
    %v25 = vld [vmem:[#allocation2 + $0x10] sm:$0xff]
    %v26 = vld [vmem:[#allocation2 + $0x18] sm:$0xff]
    %v27 = vld [vmem:[#allocation2 + $0x20] sm:$0xff]
    %v28 = vld [vmem:[#allocation2 + $0x28] sm:$0xff]
    %v29 = vld [vmem:[#allocation2 + $0x30] sm:$0xff]
    %v30 = vld [vmem:[#allocation2 + $0x38] sm:$0xff]
    %v31 = vld [vmem:[#allocation2 + $0x40] sm:$0xff]
    %v32 = vld [vmem:[#allocation2 + $0x48] sm:$0xff]
    %v33 = vld [vmem:[#allocation2 + $0x50] sm:$0xff]
    %v34 = vld [vmem:[#allocation2 + $0x58] sm:$0xff]
    %v35 = vld [vmem:[#allocation2 + $0x60] sm:$0xff]
    %v36 = vld [vmem:[#allocation2 + $0x68] sm:$0xff]
    %v37 = vld [vmem:[#allocation2 + $0x70] sm:$0xff]
    %v38 = vld [vmem:[#allocation2 + $0x78] sm:$0xff]
    %v39 = vld [vmem:[#allocation2 + $0x80] sm:$0xff]
    %v40 = vld [vmem:[#allocation2 + $0x88] sm:$0xff]
    %v41 = vld [vmem:[#allocation2 + $0x90] sm:$0xff]
    %v42 = vld [vmem:[#allocation2 + $0x98] sm:$0xff]
    %v43 = vld [vmem:[#allocation2 + $0xa0] sm:$0xff]
    %v44 = vld [vmem:[#allocation2 + $0xa8] sm:$0xff]
    %v45 = vld [vmem:[#allocation2 + $0xb0] sm:$0xff]
    %v46 = vld [vmem:[#allocation2 + $0xb8] sm:$0xff]
    %v47 = vld [vmem:[#allocation2 + $0xc0] sm:$0xff]
    %v48 = vld [vmem:[#allocation2 + $0xc8] sm:$0xff]
    %v49 = vld [vmem:[#allocation2 + $0xd0] sm:$0xff]
    %v50 = vld [vmem:[#allocation2 + $0xd8] sm:$0xff]
    %v51 = vld [vmem:[#allocation2 + $0xe0] sm:$0xff]
    %v52 = vld [vmem:[#allocation2 + $0xe8] sm:$0xff]
    %v53 = vld [vmem:[#allocation2 + $0xf0] sm:$0xff]
    %v54 = vld [vmem:[#allocation2 + $0xf8] sm:$0xff]
    %v55 = vmul.f32 %v23, %v23
    %v56 = vmul.f32 %v24, %v24
    %v57 = vmul.f32 %v25, %v25
    %v58 = vmul.f32 %v26, %v26
    %v59 = vmul.f32 %v27, %v27
    %v60 = vmul.f32 %v28, %v28
    %v61 = vmul.f32 %v29, %v29
    %v62 = vmul.f32 %v30, %v30
    %v63 = vmul.f32 %v31, %v31
    %v64 = vmul.f32 %v32, %v32
    %v65 = vmul.f32 %v33, %v33
    %v66 = vmul.f32 %v34, %v34
    %v67 = vmul.f32 %v35, %v35
    %v68 = vmul.f32 %v36, %v36
    %v69 = vmul.f32 %v37, %v37
    %v70 = vmul.f32 %v38, %v38
    %v71 = vmul.f32 %v39, %v39
    %v72 = vmul.f32 %v40, %v40
    %v73 = vmul.f32 %v41, %v41
    %v74 = vmul.f32 %v42, %v42
    %v75 = vmul.f32 %v43, %v43
    %v76 = vmul.f32 %v44, %v44
    %v77 = vmul.f32 %v45, %v45
    %v78 = vmul.f32 %v46, %v46
    %v79 = vmul.f32 %v47, %v47
    %v80 = vmul.f32 %v48, %v48
    %v81 = vmul.f32 %v49, %v49
    %v82 = vmul.f32 %v50, %v50
    %v83 = vmul.f32 %v51, %v51
    %v84 = vmul.f32 %v52, %v52
    %v85 = vmul.f32 %v53, %v53
    %v86 = vmul.f32 %v54, %v54
    %87 = vadd.xlane.f32.xlu0 %v55
    %v88 = vpop.xlane.xlu0 %87
    %89 = vadd.xlane.f32.xlu0 %v56
    %v90 = vpop.xlane.xlu0 %89
    %91 = vadd.xlane.f32.xlu0 %v57
    %v92 = vpop.xlane.xlu0 %91
    %93 = vadd.xlane.f32.xlu0 %v58
    %v94 = vpop.xlane.xlu0 %93
    %95 = vadd.xlane.f32.xlu0 %v59
    %v96 = vpop.xlane.xlu0 %95
    %97 = vadd.xlane.f32.xlu0 %v60
    %v98 = vpop.xlane.xlu0 %97
    %99 = vadd.xlane.f32.xlu0 %v61
    %v100 = vpop.xlane.xlu0 %99
    %101 = vadd.xlane.f32.xlu0 %v62
    %v102 = vpop.xlane.xlu0 %101
    %103 = vadd.xlane.f32.xlu0 %v63
    %v104 = vpop.xlane.xlu0 %103
    %105 = vadd.xlane.f32.xlu0 %v64
    %v106 = vpop.xlane.xlu0 %105
    %107 = vadd.xlane.f32.xlu0 %v65
    %v108 = vpop.xlane.xlu0 %107
    %109 = vadd.xlane.f32.xlu0 %v66
    %v110 = vpop.xlane.xlu0 %109
    %111 = vadd.xlane.f32.xlu0 %v67
    %v112 = vpop.xlane.xlu0 %111
    %113 = vadd.xlane.f32.xlu0 %v68
    %v114 = vpop.xlane.xlu0 %113
    %115 = vadd.xlane.f32.xlu0 %v69
    %v116 = vpop.xlane.xlu0 %115
    %117 = vadd.xlane.f32.xlu0 %v70
    %v118 = vpop.xlane.xlu0 %117
    %119 = vadd.xlane.f32.xlu0 %v71
    %v120 = vpop.xlane.xlu0 %119
    %121 = vadd.xlane.f32.xlu0 %v72
    %v122 = vpop.xlane.xlu0 %121
    %123 = vadd.xlane.f32.xlu0 %v73
    %v124 = vpop.xlane.xlu0 %123
    %125 = vadd.xlane.f32.xlu0 %v74
    %v126 = vpop.xlane.xlu0 %125
    %127 = vadd.xlane.f32.xlu0 %v75
    %v128 = vpop.xlane.xlu0 %127
    %129 = vadd.xlane.f32.xlu0 %v76
    %v130 = vpop.xlane.xlu0 %129
    %131 = vadd.xlane.f32.xlu0 %v77
    %v132 = vpop.xlane.xlu0 %131
    %133 = vadd.xlane.f32.xlu0 %v78
    %v134 = vpop.xlane.xlu0 %133
    %135 = vadd.xlane.f32.xlu0 %v79
    %v136 = vpop.xlane.xlu0 %135
    %137 = vadd.xlane.f32.xlu0 %v80
    %v138 = vpop.xlane.xlu0 %137
    %139 = vadd.xlane.f32.xlu0 %v81
    %v140 = vpop.xlane.xlu0 %139
    %141 = vadd.xlane.f32.xlu0 %v82
    %v142 = vpop.xlane.xlu0 %141
    %143 = vadd.xlane.f32.xlu0 %v83
    %v144 = vpop.xlane.xlu0 %143
    %145 = vadd.xlane.f32.xlu0 %v84
    %v146 = vpop.xlane.xlu0 %145
    %147 = vadd.xlane.f32.xlu0 %v85
    %v148 = vpop.xlane.xlu0 %147
    %149 = vadd.xlane.f32.xlu0 %v86
    %v150 = vpop.xlane.xlu0 %149
    %v151 = vmax.f32 %v88, 1e-16
    %v152 = vmax.f32 %v90, 1e-16
    %v153 = vmax.f32 %v92, 1e-16
    %v154 = vmax.f32 %v94, 1e-16
    %v155 = vmax.f32 %v96, 1e-16
    %v156 = vmax.f32 %v98, 1e-16
    %v157 = vmax.f32 %v100, 1e-16
    %v158 = vmax.f32 %v102, 1e-16
    %v159 = vmax.f32 %v104, 1e-16
    %v160 = vmax.f32 %v106, 1e-16
    %v161 = vmax.f32 %v108, 1e-16
    %v162 = vmax.f32 %v110, 1e-16
    %v163 = vmax.f32 %v112, 1e-16
    %v164 = vmax.f32 %v114, 1e-16
    %v165 = vmax.f32 %v116, 1e-16
    %v166 = vmax.f32 %v118, 1e-16
    %v167 = vmax.f32 %v120, 1e-16
    %v168 = vmax.f32 %v122, 1e-16
    %v169 = vmax.f32 %v124, 1e-16
    %v170 = vmax.f32 %v126, 1e-16
    %v171 = vmax.f32 %v128, 1e-16
    %v172 = vmax.f32 %v130, 1e-16
    %v173 = vmax.f32 %v132, 1e-16
    %v174 = vmax.f32 %v134, 1e-16
    %v175 = vmax.f32 %v136, 1e-16
    %v176 = vmax.f32 %v138, 1e-16
    %v177 = vmax.f32 %v140, 1e-16
    %v178 = vmax.f32 %v142, 1e-16
    %v179 = vmax.f32 %v144, 1e-16
    %v180 = vmax.f32 %v146, 1e-16
    %v181 = vmax.f32 %v148, 1e-16
    %v182 = vmax.f32 %v150, 1e-16
    %v183 = vrsqrt.pop %v151
    %v184 = vrsqrt.pop %v152
    %v185 = vrsqrt.pop %v153
    %v186 = vrsqrt.pop %v154
    %v187 = vrsqrt.pop %v155
    %v188 = vrsqrt.pop %v156
    %v189 = vrsqrt.pop %v157
    %v190 = vrsqrt.pop %v158
    %v191 = vrsqrt.pop %v159
    %v192 = vrsqrt.pop %v160
    %v193 = vrsqrt.pop %v161
    %v194 = vrsqrt.pop %v162
    %v195 = vrsqrt.pop %v163
    %v196 = vrsqrt.pop %v164
    %v197 = vrsqrt.pop %v165
    %v198 = vrsqrt.pop %v166
    %v199 = vrsqrt.pop %v167
    %v200 = vrsqrt.pop %v168
    %v201 = vrsqrt.pop %v169
    %v202 = vrsqrt.pop %v170
    %v203 = vrsqrt.pop %v171
    %v204 = vrsqrt.pop %v172
    %v205 = vrsqrt.pop %v173
    %v206 = vrsqrt.pop %v174
    %v207 = vrsqrt.pop %v175
    %v208 = vrsqrt.pop %v176
    %v209 = vrsqrt.pop %v177
    %v210 = vrsqrt.pop %v178
    %v211 = vrsqrt.pop %v179
    %v212 = vrsqrt.pop %v180
    %v213 = vrsqrt.pop %v181
    %v214 = vrsqrt.pop %v182
    %v215 = vmul.f32 %v23, %v183
    %v216 = vmul.f32 %v24, %v184
    %v217 = vmul.f32 %v25, %v185
    %v218 = vmul.f32 %v26, %v186
    %v219 = vmul.f32 %v27, %v187
    %v220 = vmul.f32 %v28, %v188
    %v221 = vmul.f32 %v29, %v189
    %v222 = vmul.f32 %v30, %v190
    %v223 = vmul.f32 %v31, %v191
    %v224 = vmul.f32 %v32, %v192
    %v225 = vmul.f32 %v33, %v193
    %v226 = vmul.f32 %v34, %v194
    %v227 = vmul.f32 %v35, %v195
    %v228 = vmul.f32 %v36, %v196
    %v229 = vmul.f32 %v37, %v197
    %v230 = vmul.f32 %v38, %v198
    %v231 = vmul.f32 %v39, %v199
    %v232 = vmul.f32 %v40, %v200
    %v233 = vmul.f32 %v41, %v201
    %v234 = vmul.f32 %v42, %v202
    %v235 = vmul.f32 %v43, %v203
    %v236 = vmul.f32 %v44, %v204
    %v237 = vmul.f32 %v45, %v205
    %v238 = vmul.f32 %v46, %v206
    %v239 = vmul.f32 %v47, %v207
    %v240 = vmul.f32 %v48, %v208
    %v241 = vmul.f32 %v49, %v209
    %v242 = vmul.f32 %v50, %v210
    %v243 = vmul.f32 %v51, %v211
    %v244 = vmul.f32 %v52, %v212
    %v245 = vmul.f32 %v53, %v213
    %v246 = vmul.f32 %v54, %v214
    %v247 = vpack.c.bf16 %v216, %v215
    %v248 = vpack.c.bf16 %v218, %v217
    %v249 = vpack.c.bf16 %v220, %v219
    %v250 = vpack.c.bf16 %v222, %v221
    %v251 = vpack.c.bf16 %v224, %v223
    %v252 = vpack.c.bf16 %v226, %v225
    %v253 = vpack.c.bf16 %v228, %v227
    %v254 = vpack.c.bf16 %v230, %v229
    %v255 = vpack.c.bf16 %v232, %v231
    %v256 = vpack.c.bf16 %v234, %v233
    %v257 = vpack.c.bf16 %v236, %v235
    %v258 = vpack.c.bf16 %v238, %v237
    %v259 = vpack.c.bf16 %v240, %v239
    %v260 = vpack.c.bf16 %v242, %v241
    %v261 = vpack.c.bf16 %v244, %v243
    %v262 = vpack.c.bf16 %v246, %v245
    %v279 = vunpack.c.l.b16 %v247
    %v280 = vunpack.c.h.b16 %v247
    %v281 = vunpack.c.l.b16 %v248
    %v282 = vunpack.c.h.b16 %v248
    %v283 = vunpack.c.l.b16 %v249
    %v284 = vunpack.c.h.b16 %v249
    %v285 = vunpack.c.l.b16 %v250
    %v286 = vunpack.c.h.b16 %v250
    %v287 = vunpack.c.l.b16 %v251
    %v288 = vunpack.c.h.b16 %v251
    %v289 = vunpack.c.l.b16 %v252
    %v290 = vunpack.c.h.b16 %v252
    %v291 = vunpack.c.l.b16 %v253
    %v292 = vunpack.c.h.b16 %v253
    %v293 = vunpack.c.l.b16 %v254
    %v294 = vunpack.c.h.b16 %v254
    %v295 = vunpack.c.l.b16 %v255
    %v296 = vunpack.c.h.b16 %v255
    %v297 = vunpack.c.l.b16 %v256
    %v298 = vunpack.c.h.b16 %v256
    %v299 = vunpack.c.l.b16 %v257
    %v300 = vunpack.c.h.b16 %v257
    %v301 = vunpack.c.l.b16 %v258
    %v302 = vunpack.c.h.b16 %v258
    %v303 = vunpack.c.l.b16 %v259
    %v304 = vunpack.c.h.b16 %v259
    %v305 = vunpack.c.l.b16 %v260
    %v306 = vunpack.c.h.b16 %v260
    %v307 = vunpack.c.l.b16 %v261
    %v308 = vunpack.c.h.b16 %v261
    %v309 = vunpack.c.l.b16 %v262
    %v310 = vunpack.c.h.b16 %v262
    %v311 = vpack.c.b16 %v279, %v279
    %v312 = vpack.c.b16 %v280, %v280
    %v313 = vpack.c.b16 %v281, %v281
    %v314 = vpack.c.b16 %v282, %v282
    %v315 = vpack.c.b16 %v283, %v283
    %v316 = vpack.c.b16 %v284, %v284
    %v317 = vpack.c.b16 %v285, %v285
    %v318 = vpack.c.b16 %v286, %v286
    %v319 = vpack.c.b16 %v287, %v287
    %v320 = vpack.c.b16 %v288, %v288
    %v321 = vpack.c.b16 %v289, %v289
    %v322 = vpack.c.b16 %v290, %v290
    %v323 = vpack.c.b16 %v291, %v291
    %v324 = vpack.c.b16 %v292, %v292
    %v325 = vpack.c.b16 %v293, %v293
    %v326 = vpack.c.b16 %v294, %v294
    %v327 = vpack.c.b16 %v295, %v295
    %v328 = vpack.c.b16 %v296, %v296
    %v329 = vpack.c.b16 %v297, %v297
    %v330 = vpack.c.b16 %v298, %v298
    %v331 = vpack.c.b16 %v299, %v299
    %v332 = vpack.c.b16 %v300, %v300
    %v333 = vpack.c.b16 %v301, %v301
    %v334 = vpack.c.b16 %v302, %v302
    %v335 = vpack.c.b16 %v303, %v303
    %v336 = vpack.c.b16 %v304, %v304
    %v337 = vpack.c.b16 %v305, %v305
    %v338 = vpack.c.b16 %v306, %v306
    %v339 = vpack.c.b16 %v307, %v307
    %v340 = vpack.c.b16 %v308, %v308
    %v341 = vpack.c.b16 %v309, %v309
    %v342 = vpack.c.b16 %v310, %v310
    %375 = vst [vmem:[#allocation5] sm:$0xf] %v311
    %376 = vst [vmem:[#allocation5 + $0x4] sm:$0xf] %v312
    %377 = vst [vmem:[#allocation5 + $0x8] sm:$0xf] %v313
    %378 = vst [vmem:[#allocation5 + $0xc] sm:$0xf] %v314
    %379 = vst [vmem:[#allocation5 + $0x10] sm:$0xf] %v315
    %380 = vst [vmem:[#allocation5 + $0x14] sm:$0xf] %v316
    %381 = vst [vmem:[#allocation5 + $0x18] sm:$0xf] %v317
    %382 = vst [vmem:[#allocation5 + $0x1c] sm:$0xf] %v318
    %383 = vst [vmem:[#allocation5 + $0x20] sm:$0xf] %v319
    %384 = vst [vmem:[#allocation5 + $0x24] sm:$0xf] %v320
    %385 = vst [vmem:[#allocation5 + $0x28] sm:$0xf] %v321
    %386 = vst [vmem:[#allocation5 + $0x2c] sm:$0xf] %v322
    %387 = vst [vmem:[#allocation5 + $0x30] sm:$0xf] %v323
    %388 = vst [vmem:[#allocation5 + $0x34] sm:$0xf] %v324
    %389 = vst [vmem:[#allocation5 + $0x38] sm:$0xf] %v325
    %390 = vst [vmem:[#allocation5 + $0x3c] sm:$0xf] %v326
    %391 = vst [vmem:[#allocation5 + $0x40] sm:$0xf] %v327
    %392 = vst [vmem:[#allocation5 + $0x44] sm:$0xf] %v328
    %393 = vst [vmem:[#allocation5 + $0x48] sm:$0xf] %v329
    %394 = vst [vmem:[#allocation5 + $0x4c] sm:$0xf] %v330
    %395 = vst [vmem:[#allocation5 + $0x50] sm:$0xf] %v331
    %396 = vst [vmem:[#allocation5 + $0x54] sm:$0xf] %v332
    %397 = vst [vmem:[#allocation5 + $0x58] sm:$0xf] %v333
    %398 = vst [vmem:[#allocation5 + $0x5c] sm:$0xf] %v334
    %399 = vst [vmem:[#allocation5 + $0x60] sm:$0xf] %v335
    %400 = vst [vmem:[#allocation5 + $0x64] sm:$0xf] %v336
    %401 = vst [vmem:[#allocation5 + $0x68] sm:$0xf] %v337
    %402 = vst [vmem:[#allocation5 + $0x6c] sm:$0xf] %v338
    %403 = vst [vmem:[#allocation5 + $0x70] sm:$0xf] %v339
    %404 = vst [vmem:[#allocation5 + $0x74] sm:$0xf] %v340
    %405 = vst [vmem:[#allocation5 + $0x78] sm:$0xf] %v341
    %406 = vst [vmem:[#allocation5 + $0x7c] sm:$0xf] %v342
    // Predicated region
    $region10: #{tpu_custom_call.1} parent=1 // pred_check
      _
    $region11: #{tpu_custom_call.1} parent=1 // pred_check_branch
      %408 = sbr.rel (0) target = $region13
    $region12: #{tpu_custom_call.1} parent=1 // pred_region
      %s410 = ssub.s32 2048, 2048
      %411 = vsyncadd [#allocation4], %s410
      %s412 = sshll.u32 [#allocation5], 4
      %s413 = int_to_ptr.vmem [resolvable:$true] %s412
      %418 = dma.vmem_to_hbm [thread:$0]  %s413, 2048, %s1, [#allocation4], 64, 64, 4
    $region13: #{tpu_custom_call.1} parent=1 // pred_fallthru
      _
    // Predicated region
    $region14: #{tpu_custom_call.1} parent=1 // pred_check
      _
    $region15: #{tpu_custom_call.1} parent=1 // pred_check_branch
      %420 = sbr.rel (0) target = $region17
    $region16: #{tpu_custom_call.1} parent=1 // pred_region
      %421 = dma.done [#allocation4], 2048
    $region17: #{tpu_custom_call.1} parent=1 // pred_fallthru
      _
    %422 = vsyncpa [#allocation3], 1
    %423 = vsyncpa [#allocation4], 1

</llo_original>
